<compile_context>
chip_gen: v6e
topology: v6e:2x2x1
jax: 0.10.0
libtpu: 0.0.40
codegen_flags: <defaults>
</compile_context>

<pallas_src>
import functools

import jax
import jax.numpy as jnp
from jax import lax
from jax.experimental import pallas as pl
from jax.experimental.pallas import tpu as pltpu


def _addnorm_kernel(x_ref, y_ref, w_ref, b_ref, o_ref, *, eps, inv_d):
    """Unpacked path: one logical row per (tm, D) tile row."""
    s = x_ref[...].astype(jnp.float32) + y_ref[...].astype(jnp.float32)
    mean = jnp.sum(s, axis=-1, keepdims=True) * inv_d
    d = s - mean
    var = jnp.sum(d * d, axis=-1, keepdims=True) * inv_d   # two-pass: exact, >= 0
    inv = lax.rsqrt(var + eps)
    w = w_ref[...].astype(jnp.float32)
    b = b_ref[...].astype(jnp.float32)
    o_ref[...] = (d * (inv * w) + b).astype(o_ref.dtype)


def _addnorm_packed_kernel(x_ref, y_ref, w_ref, b_ref, o_ref, *, eps, inv_d,
                           seg_d, n_seg):
    """Lane-packed path: n_seg logical rows (each seg_d lanes) per 128-lane row.

    Segmented mean/var via per-segment lane masks: only full-width VPU/XLU ops
    (no lane slicing, no reshapes), so loads and stores stay 128-lane dense.
    """
    s = x_ref[...].astype(jnp.float32) + y_ref[...].astype(jnp.float32)
    lane = lax.broadcasted_iota(jnp.int32, (1, s.shape[-1]), 1)
    w = w_ref[...].astype(jnp.float32)
    b = b_ref[...].astype(jnp.float32)
    out = jnp.zeros_like(s)
    for j in range(n_seg):                      # trace-time unroll, n_seg <= 8
        in_seg = jnp.logical_and(lane >= j * seg_d, lane < (j + 1) * seg_d)
        mf = jnp.where(in_seg, 1.0, 0.0)        # (1, L) f32 segment mask
        mean = jnp.sum(s * mf, axis=-1, keepdims=True) * inv_d
        d = (s - mean) * mf                     # zero outside segment j
        var = jnp.sum(d * d, axis=-1, keepdims=True) * inv_d
        inv = lax.rsqrt(var + eps)
        out = out + d * inv * w                 # only segment-j lanes contribute
    o_ref[...] = (out + b).astype(o_ref.dtype)


def _sublane_pack(dtype):
    # f32 -> 8, bf16/f16 -> 16, int8/fp8 -> 32 rows per packed sublane group.
    return max(8, 32 // jnp.dtype(dtype).itemsize)


def _vmem_budget_and_limit():
    """Generation-aware VMEM sizing (v5e/v6e: 128 MiB; v7x: 64 MiB per core)."""
    try:
        cap = int(pltpu.get_tpu_info().vmem_capacity_bytes)
    except Exception:                 # off-TPU tracing / older runtimes
        cap = 64 * 2**20              # conservative fallback = v7x per-core VMEM
    budget = max(int(cap * 0.40), 8 * 2**20)   # streamed tiles + f32 temporaries
    limit_cap = int(cap * 0.90)                # headroom for compiler scratch
    return budget, limit_cap


def _choose_tile_rows(M, L, dtype, budget):
    itemsize = jnp.dtype(dtype).itemsize
    sub = _sublane_pack(dtype)
    # Per-row footprint: x/y/out tiles double-buffered + f32 temporaries (s, d).
    per_row = 6 * L * itemsize + 8 * L
    tm_max = max(sub, budget // max(per_row, 1))   # only bound: the VMEM budget
    n_steps = pl.cdiv(M, tm_max)
    if M > sub:
        # >= 2 grid steps so v7x's two TensorCores both get work (no-op on the
        # single-TC v5e/v6e), and so the ragged tail is balanced, not near-empty.
        n_steps = max(n_steps, 2)
    tm = pl.cdiv(M, n_steps)
    tm = max(sub, pl.cdiv(tm, sub) * sub)
    tm = min(tm, pl.cdiv(M, sub) * sub)            # never bigger than needed
    return int(tm)


def add_norm(x, sublayer_output, weight, bias, *, eps=1e-6, tile_rows=None):
    """LayerNorm(x + sublayer_output) over the last dim; matches nn.LayerNorm(D, eps)."""
    assert x.shape == sublayer_output.shape
    D = x.shape[-1]
    assert weight.shape == (D,) and bias.shape == (D,)

    orig_shape = x.shape
    dtype = x.dtype
    x2 = x.reshape(-1, D)
    y2 = sublayer_output.reshape(-1, D)
    M = x2.shape[0]

    # Lane packing for thin embed dims: k rows share one 128-lane row so DMAs and
    # stores are lane-dense (demo D=32 -> k=4).  Only when it divides cleanly.
    k = 1
    if D < 128 and 128 % D == 0 and (128 // D) <= 8 and M % (128 // D) == 0:
        k = 128 // D
    L = k * D
    M2 = M // k
    if k > 1:
        x2 = x2.reshape(M2, L)
        y2 = y2.reshape(M2, L)
        w2 = jnp.tile(weight, k).reshape(1, L)
        b2 = jnp.tile(bias, k).reshape(1, L)
    else:
        w2 = weight.reshape(1, D)
        b2 = bias.reshape(1, D)

    sub_rows = _sublane_pack(dtype)
    budget, limit_cap = _vmem_budget_and_limit()
    if tile_rows is None:
        tm = _choose_tile_rows(M2, L, dtype, budget)
    else:
        tm = max(sub_rows, (int(tile_rows) // sub_rows) * sub_rows)

    itemsize = jnp.dtype(dtype).itemsize
    # Streamed tiles (double-buffered) + in-kernel f32 temporaries + params.
    tile_bytes = tm * (6 * L * itemsize + 8 * L) + 2 * L * 4
    vmem_limit = int(min(limit_cap, max(32 * 2**20, 2 * tile_bytes)))

    if k > 1:
        kernel = functools.partial(_addnorm_packed_kernel, eps=float(eps),
                                   inv_d=1.0 / D, seg_d=D, n_seg=k)
    else:
        kernel = functools.partial(_addnorm_kernel, eps=float(eps), inv_d=1.0 / D)

    # TODO(synk): for very large D forcing small tm on v7x, sweep
    # pipeline_mode=pl.Buffered(3) on the two streamed input BlockSpecs.
    out = pl.pallas_call(
        kernel,
        out_shape=jax.ShapeDtypeStruct((M2, L), dtype),
        grid_spec=pltpu.PrefetchScalarGridSpec(
            num_scalar_prefetch=0,
            grid=(pl.cdiv(M2, tm),),          # no host-side pad; ragged tail masked
            in_specs=[
                pl.BlockSpec((tm, L), lambda i: (i, 0)),
                pl.BlockSpec((tm, L), lambda i: (i, 0)),
                pl.BlockSpec((1, L), lambda i: (0, 0)),
                pl.BlockSpec((1, L), lambda i: (0, 0)),
            ],
            out_specs=pl.BlockSpec((tm, L), lambda i: (i, 0)),
        ),
        compiler_params=pltpu.CompilerParams(
            dimension_semantics=("parallel",),  # row axis shards across TCs (v7x)
            vmem_limit_bytes=vmem_limit,
        ),
    )(x2, y2, w2, b2)

    return out.reshape(orig_shape)


def _reference(x, sub, weight, bias, eps):
    s = x + sub
    mean = jnp.mean(s, axis=-1, keepdims=True)
    var = jnp.mean((s - mean) ** 2, axis=-1, keepdims=True)
    return (s - mean) / jnp.sqrt(var + eps) * weight + bias


if __name__ == "__main__":
    def run_case(B, S, D, tile_rows=None, seed=0):
        kx, ky = jax.random.split(jax.random.PRNGKey(seed))
        x = jax.random.normal(kx, (B, S, D), dtype=jnp.float32)
        sub = jax.random.normal(ky, (B, S, D), dtype=jnp.float32)
        # Deterministic LayerNorm params (perturbed so the affine is exercised).
        weight = 1.0 + 0.01 * jnp.arange(D, dtype=jnp.float32)
        bias = 0.001 * jnp.arange(D, dtype=jnp.float32)
        out = jax.block_until_ready(
            add_norm(x, sub, weight, bias, eps=1e-6, tile_rows=tile_rows))
        ref = _reference(x, sub, weight, bias, 1e-6)
        assert out.shape == x.shape
        assert jnp.allclose(out, ref, atol=1e-5, rtol=1e-5), (B, S, D)

    # 1) Module demo shapes (batch=2, seq=8, embed_dim=32): lane-packed path
    #    (k=4 rows per 128-lane row), single tile.  Uses PRNGKey(0).
    run_case(2, 8, 32, seed=0)
    # 2) Packed path with a multi-step grid and a ragged last tile
    #    (M=300 rows -> 75 packed rows, tile_rows=32 -> grid of 3).
    run_case(3, 100, 32, tile_rows=32, seed=1)
    # 3) Unpacked lane-dense path (D=128), auto tile sizing -> 2 grid steps.
    run_case(2, 16, 128, seed=2)
    # 4) Unpacked path with D not a divisor of 128 (masked lanes, still correct).
    run_case(2, 8, 48, seed=3)

    print("KERNEL_OK")
</pallas_src>

<mosaic_0001>
module attributes {stable_mosaic.version = 11 : i64} {
  func.func @_addnorm_packed_kernel(%arg0: i32, %arg1: memref<8x128xf32, #tpu.memory_space<vmem>>, %arg2: memref<8x128xf32, #tpu.memory_space<vmem>>, %arg3: memref<1x128xf32, #tpu.memory_space<vmem>>, %arg4: memref<1x128xf32, #tpu.memory_space<vmem>>, %arg5: memref<8x128xf32, #tpu.memory_space<vmem>>) attributes {dimension_semantics = [#tpu.dimension_semantics<parallel>], iteration_bounds = array<i64: 1>, scalar_prefetch = 0 : i64, scratch_operands = 0 : i64, tpu.core_type = #tpu.core_type<tc>, window_params = [{transform_indices = @transform_0, window_bounds = array<i64: 8, 128>}, {transform_indices = @transform_1, window_bounds = array<i64: 8, 128>}, {pipeline_mode = #tpu.pipeline_mode<synchronous>, transform_indices = @transform_2, window_bounds = array<i64: 1, 128>}, {pipeline_mode = #tpu.pipeline_mode<synchronous>, transform_indices = @transform_3, window_bounds = array<i64: 1, 128>}, {transform_indices = @transform_4, window_bounds = array<i64: 8, 128>}]} {
    %c0 = arith.constant 0 : index
    %c0_0 = arith.constant 0 : index
    %0 = vector.load %arg1[%c0, %c0_0] : memref<8x128xf32, #tpu.memory_space<vmem>>, vector<8x128xf32>
    %c0_1 = arith.constant 0 : index
    %c0_2 = arith.constant 0 : index
    %1 = vector.load %arg2[%c0_1, %c0_2] : memref<8x128xf32, #tpu.memory_space<vmem>>, vector<8x128xf32>
    %2 = arith.addf %0, %1 : vector<8x128xf32>
    %3 = tpu.iota {dimensions = array<i32: 1>} : vector<1x128xi32>
    %c0_3 = arith.constant 0 : index
    %c0_4 = arith.constant 0 : index
    %4 = vector.load %arg3[%c0_3, %c0_4] : memref<1x128xf32, #tpu.memory_space<vmem>>, vector<1x128xf32>
    %c0_5 = arith.constant 0 : index
    %c0_6 = arith.constant 0 : index
    %5 = vector.load %arg4[%c0_5, %c0_6] : memref<1x128xf32, #tpu.memory_space<vmem>>, vector<1x128xf32>
    %cst = arith.constant 0.000000e+00 : f32
    %6 = vector.broadcast %cst : f32 to vector<8x128xf32>
    %c0_i32 = arith.constant 0 : i32
    %7 = vector.broadcast %c0_i32 : i32 to vector<1x128xi32>
    %8 = arith.cmpi sge, %3, %7 : vector<1x128xi32>
    %c32_i32 = arith.constant 32 : i32
    %9 = vector.broadcast %c32_i32 : i32 to vector<1x128xi32>
    %10 = arith.cmpi slt, %3, %9 : vector<1x128xi32>
    %11 = arith.andi %8, %10 : vector<1x128xi1>
    %cst_7 = arith.constant 1.000000e+00 : f32
    %cst_8 = arith.constant 0.000000e+00 : f32
    %12 = vector.broadcast %cst_7 : f32 to vector<1x128xf32>
    %13 = vector.broadcast %cst_8 : f32 to vector<1x128xf32>
    %14 = arith.select %11, %12, %13 : vector<1x128xi1>, vector<1x128xf32>
    %15 = vector.broadcast %14 : vector<1x128xf32> to vector<8x128xf32>
    %16 = arith.mulf %2, %15 : vector<8x128xf32>
    %cst_9 = arith.constant dense<0.000000e+00> : vector<8xf32>
    %17 = vector.multi_reduction <add>, %16, %cst_9 [1] : vector<8x128xf32> to vector<8xf32>
    %18 = vector.shape_cast %17 : vector<8xf32> to vector<8x1xf32>
    %cst_10 = arith.constant 3.125000e-02 : f32
    %19 = vector.broadcast %cst_10 : f32 to vector<8x1xf32>
    %20 = arith.mulf %18, %19 : vector<8x1xf32>
    %21 = vector.broadcast %20 : vector<8x1xf32> to vector<8x128xf32>
    %22 = arith.subf %2, %21 : vector<8x128xf32>
    %23 = vector.broadcast %14 : vector<1x128xf32> to vector<8x128xf32>
    %24 = arith.mulf %22, %23 : vector<8x128xf32>
    %25 = arith.mulf %24, %24 : vector<8x128xf32>
    %cst_11 = arith.constant dense<0.000000e+00> : vector<8xf32>
    %26 = vector.multi_reduction <add>, %25, %cst_11 [1] : vector<8x128xf32> to vector<8xf32>
    %27 = vector.shape_cast %26 : vector<8xf32> to vector<8x1xf32>
    %cst_12 = arith.constant 3.125000e-02 : f32
    %28 = vector.broadcast %cst_12 : f32 to vector<8x1xf32>
    %29 = arith.mulf %27, %28 : vector<8x1xf32>
    %cst_13 = arith.constant 9.99999997E-7 : f32
    %30 = vector.broadcast %cst_13 : f32 to vector<8x1xf32>
    %31 = arith.addf %29, %30 : vector<8x1xf32>
    %32 = math.rsqrt %31 : vector<8x1xf32>
    %33 = vector.broadcast %32 : vector<8x1xf32> to vector<8x128xf32>
    %34 = arith.mulf %24, %33 : vector<8x128xf32>
    %35 = vector.broadcast %4 : vector<1x128xf32> to vector<8x128xf32>
    %36 = arith.mulf %34, %35 : vector<8x128xf32>
    %37 = arith.addf %6, %36 : vector<8x128xf32>
    %c32_i32_14 = arith.constant 32 : i32
    %38 = vector.broadcast %c32_i32_14 : i32 to vector<1x128xi32>
    %39 = arith.cmpi sge, %3, %38 : vector<1x128xi32>
    %c64_i32 = arith.constant 64 : i32
    %40 = vector.broadcast %c64_i32 : i32 to vector<1x128xi32>
    %41 = arith.cmpi slt, %3, %40 : vector<1x128xi32>
    %42 = arith.andi %39, %41 : vector<1x128xi1>
    %cst_15 = arith.constant 1.000000e+00 : f32
    %cst_16 = arith.constant 0.000000e+00 : f32
    %43 = vector.broadcast %cst_15 : f32 to vector<1x128xf32>
    %44 = vector.broadcast %cst_16 : f32 to vector<1x128xf32>
    %45 = arith.select %42, %43, %44 : vector<1x128xi1>, vector<1x128xf32>
    %46 = vector.broadcast %45 : vector<1x128xf32> to vector<8x128xf32>
    %47 = arith.mulf %2, %46 : vector<8x128xf32>
    %cst_17 = arith.constant dense<0.000000e+00> : vector<8xf32>
    %48 = vector.multi_reduction <add>, %47, %cst_17 [1] : vector<8x128xf32> to vector<8xf32>
    %49 = vector.shape_cast %48 : vector<8xf32> to vector<8x1xf32>
    %cst_18 = arith.constant 3.125000e-02 : f32
    %50 = vector.broadcast %cst_18 : f32 to vector<8x1xf32>
    %51 = arith.mulf %49, %50 : vector<8x1xf32>
    %52 = vector.broadcast %51 : vector<8x1xf32> to vector<8x128xf32>
    %53 = arith.subf %2, %52 : vector<8x128xf32>
    %54 = vector.broadcast %45 : vector<1x128xf32> to vector<8x128xf32>
    %55 = arith.mulf %53, %54 : vector<8x128xf32>
    %56 = arith.mulf %55, %55 : vector<8x128xf32>
    %cst_19 = arith.constant dense<0.000000e+00> : vector<8xf32>
    %57 = vector.multi_reduction <add>, %56, %cst_19 [1] : vector<8x128xf32> to vector<8xf32>
    %58 = vector.shape_cast %57 : vector<8xf32> to vector<8x1xf32>
    %cst_20 = arith.constant 3.125000e-02 : f32
    %59 = vector.broadcast %cst_20 : f32 to vector<8x1xf32>
    %60 = arith.mulf %58, %59 : vector<8x1xf32>
    %cst_21 = arith.constant 9.99999997E-7 : f32
    %61 = vector.broadcast %cst_21 : f32 to vector<8x1xf32>
    %62 = arith.addf %60, %61 : vector<8x1xf32>
    %63 = math.rsqrt %62 : vector<8x1xf32>
    %64 = vector.broadcast %63 : vector<8x1xf32> to vector<8x128xf32>
    %65 = arith.mulf %55, %64 : vector<8x128xf32>
    %66 = vector.broadcast %4 : vector<1x128xf32> to vector<8x128xf32>
    %67 = arith.mulf %65, %66 : vector<8x128xf32>
    %68 = arith.addf %37, %67 : vector<8x128xf32>
    %c64_i32_22 = arith.constant 64 : i32
    %69 = vector.broadcast %c64_i32_22 : i32 to vector<1x128xi32>
    %70 = arith.cmpi sge, %3, %69 : vector<1x128xi32>
    %c96_i32 = arith.constant 96 : i32
    %71 = vector.broadcast %c96_i32 : i32 to vector<1x128xi32>
    %72 = arith.cmpi slt, %3, %71 : vector<1x128xi32>
    %73 = arith.andi %70, %72 : vector<1x128xi1>
    %cst_23 = arith.constant 1.000000e+00 : f32
    %cst_24 = arith.constant 0.000000e+00 : f32
    %74 = vector.broadcast %cst_23 : f32 to vector<1x128xf32>
    %75 = vector.broadcast %cst_24 : f32 to vector<1x128xf32>
    %76 = arith.select %73, %74, %75 : vector<1x128xi1>, vector<1x128xf32>
    %77 = vector.broadcast %76 : vector<1x128xf32> to vector<8x128xf32>
    %78 = arith.mulf %2, %77 : vector<8x128xf32>
    %cst_25 = arith.constant dense<0.000000e+00> : vector<8xf32>
    %79 = vector.multi_reduction <add>, %78, %cst_25 [1] : vector<8x128xf32> to vector<8xf32>
    %80 = vector.shape_cast %79 : vector<8xf32> to vector<8x1xf32>
    %cst_26 = arith.constant 3.125000e-02 : f32
    %81 = vector.broadcast %cst_26 : f32 to vector<8x1xf32>
    %82 = arith.mulf %80, %81 : vector<8x1xf32>
    %83 = vector.broadcast %82 : vector<8x1xf32> to vector<8x128xf32>
    %84 = arith.subf %2, %83 : vector<8x128xf32>
    %85 = vector.broadcast %76 : vector<1x128xf32> to vector<8x128xf32>
    %86 = arith.mulf %84, %85 : vector<8x128xf32>
    %87 = arith.mulf %86, %86 : vector<8x128xf32>
    %cst_27 = arith.constant dense<0.000000e+00> : vector<8xf32>
    %88 = vector.multi_reduction <add>, %87, %cst_27 [1] : vector<8x128xf32> to vector<8xf32>
    %89 = vector.shape_cast %88 : vector<8xf32> to vector<8x1xf32>
    %cst_28 = arith.constant 3.125000e-02 : f32
    %90 = vector.broadcast %cst_28 : f32 to vector<8x1xf32>
    %91 = arith.mulf %89, %90 : vector<8x1xf32>
    %cst_29 = arith.constant 9.99999997E-7 : f32
    %92 = vector.broadcast %cst_29 : f32 to vector<8x1xf32>
    %93 = arith.addf %91, %92 : vector<8x1xf32>
    %94 = math.rsqrt %93 : vector<8x1xf32>
    %95 = vector.broadcast %94 : vector<8x1xf32> to vector<8x128xf32>
    %96 = arith.mulf %86, %95 : vector<8x128xf32>
    %97 = vector.broadcast %4 : vector<1x128xf32> to vector<8x128xf32>
    %98 = arith.mulf %96, %97 : vector<8x128xf32>
    %99 = arith.addf %68, %98 : vector<8x128xf32>
    %c96_i32_30 = arith.constant 96 : i32
    %100 = vector.broadcast %c96_i32_30 : i32 to vector<1x128xi32>
    %101 = arith.cmpi sge, %3, %100 : vector<1x128xi32>
    %c128_i32 = arith.constant 128 : i32
    %102 = vector.broadcast %c128_i32 : i32 to vector<1x128xi32>
    %103 = arith.cmpi slt, %3, %102 : vector<1x128xi32>
    %104 = arith.andi %101, %103 : vector<1x128xi1>
    %cst_31 = arith.constant 1.000000e+00 : f32
    %cst_32 = arith.constant 0.000000e+00 : f32
    %105 = vector.broadcast %cst_31 : f32 to vector<1x128xf32>
    %106 = vector.broadcast %cst_32 : f32 to vector<1x128xf32>
    %107 = arith.select %104, %105, %106 : vector<1x128xi1>, vector<1x128xf32>
    %108 = vector.broadcast %107 : vector<1x128xf32> to vector<8x128xf32>
    %109 = arith.mulf %2, %108 : vector<8x128xf32>
    %cst_33 = arith.constant dense<0.000000e+00> : vector<8xf32>
    %110 = vector.multi_reduction <add>, %109, %cst_33 [1] : vector<8x128xf32> to vector<8xf32>
    %111 = vector.shape_cast %110 : vector<8xf32> to vector<8x1xf32>
    %cst_34 = arith.constant 3.125000e-02 : f32
    %112 = vector.broadcast %cst_34 : f32 to vector<8x1xf32>
    %113 = arith.mulf %111, %112 : vector<8x1xf32>
    %114 = vector.broadcast %113 : vector<8x1xf32> to vector<8x128xf32>
    %115 = arith.subf %2, %114 : vector<8x128xf32>
    %116 = vector.broadcast %107 : vector<1x128xf32> to vector<8x128xf32>
    %117 = arith.mulf %115, %116 : vector<8x128xf32>
    %118 = arith.mulf %117, %117 : vector<8x128xf32>
    %cst_35 = arith.constant dense<0.000000e+00> : vector<8xf32>
    %119 = vector.multi_reduction <add>, %118, %cst_35 [1] : vector<8x128xf32> to vector<8xf32>
    %120 = vector.shape_cast %119 : vector<8xf32> to vector<8x1xf32>
    %cst_36 = arith.constant 3.125000e-02 : f32
    %121 = vector.broadcast %cst_36 : f32 to vector<8x1xf32>
    %122 = arith.mulf %120, %121 : vector<8x1xf32>
    %cst_37 = arith.constant 9.99999997E-7 : f32
    %123 = vector.broadcast %cst_37 : f32 to vector<8x1xf32>
    %124 = arith.addf %122, %123 : vector<8x1xf32>
    %125 = math.rsqrt %124 : vector<8x1xf32>
    %126 = vector.broadcast %125 : vector<8x1xf32> to vector<8x128xf32>
    %127 = arith.mulf %117, %126 : vector<8x128xf32>
    %128 = vector.broadcast %4 : vector<1x128xf32> to vector<8x128xf32>
    %129 = arith.mulf %127, %128 : vector<8x128xf32>
    %130 = arith.addf %99, %129 : vector<8x128xf32>
    %131 = vector.broadcast %5 : vector<1x128xf32> to vector<8x128xf32>
    %132 = arith.addf %130, %131 : vector<8x128xf32>
    %c0_38 = arith.constant 0 : index
    %c0_39 = arith.constant 0 : index
    %133 = vector.load %arg5[%c0_38, %c0_39] : memref<8x128xf32, #tpu.memory_space<vmem>>, vector<8x128xf32>
    tpu.vector_store %arg5[%c0_38, %c0_39], %132 {strides = array<i32>} : memref<8x128xf32, #tpu.memory_space<vmem>>, vector<8x128xf32>,
    return
  }
  func.func @transform_0(%arg0: i32) -> (i32, i32) {
    %c0_i32 = arith.constant 0 : i32
    %c0_i32_0 = arith.constant 0 : i32
    return %arg0, %c0_i32 : i32, i32
  }
  func.func @transform_1(%arg0: i32) -> (i32, i32) {
    %c0_i32 = arith.constant 0 : i32
    %c0_i32_0 = arith.constant 0 : i32
    return %arg0, %c0_i32 : i32, i32
  }
  func.func @transform_2(%arg0: i32) -> (i32, i32) {
    %c0_i32 = arith.constant 0 : i32
    %c0_i32_0 = arith.constant 0 : i32
    %c0_i32_1 = arith.constant 0 : i32
    return %c0_i32, %c0_i32_0 : i32, i32
  }
  func.func @transform_3(%arg0: i32) -> (i32, i32) {
    %c0_i32 = arith.constant 0 : i32
    %c0_i32_0 = arith.constant 0 : i32
    %c0_i32_1 = arith.constant 0 : i32
    return %c0_i32, %c0_i32_0 : i32, i32
  }
  func.func @transform_4(%arg0: i32) -> (i32, i32) {
    %c0_i32 = arith.constant 0 : i32
    %c0_i32_0 = arith.constant 0 : i32
    return %arg0, %c0_i32 : i32, i32
  }
}

</mosaic_0001>

<llo_original>
// kernel: tpu_custom_call.1
$region0: #{tpu_custom_call.1}
  #allocation0 [shape = 'u32[]', space=smem, size = 0x4, offset = 0x4, fixed_abs, tag = 'smem constant byte address 0x4 - core index']
  #allocation1 [shape = 'u32[144,128]{1,0:T(1,128)}', space=vmem, size = 0x12000, scoped, tag = 'internal scratch']
  %s0 = inlined_call_operand.hbm [shape: f32[4,128], index: 0, kind: input, shape index: {}]
  %s1 = inlined_call_operand.hbm [shape: f32[4,128], index: 1, kind: input, shape index: {}]
  %s2 = inlined_call_operand.vmem [shape: f32[1,128], index: 2, kind: input, shape index: {}]
  %s3 = inlined_call_operand.vmem [shape: f32[1,128], index: 3, kind: input, shape index: {}]
  %s4 = inlined_call_operand.hbm [shape: f32[4,128], index: 4, kind: output, shape index: {}]
  %s5 = sld [smem:[#allocation0]]
  $region34: #{tpu_custom_call.1} parent=0
    _
  %s7 = ssub.s32 1, %s5
  %s8 = scalar_select 0, %s7, %s5
  $region1: #{tpu_custom_call.1} parent=0
    #allocation2 [shape = 'u8[4096]{0}', space=vmem, size = 0x1000, scoped, tag = 'input window, operand 0, single buffered']
    #allocation3 [shape = 's32[1]{0}', space=sflag, size = 0x4, scoped, tag = 'scoped memory for tpu_custom_call.1']
    #allocation4 [shape = 's32[1]{0}', space=sflag, size = 0x4, scoped, tag = 'scoped memory for tpu_custom_call.1']
    #allocation5 [shape = 'u8[4096]{0}', space=vmem, size = 0x1000, scoped, tag = 'input window, operand 1, single buffered']
    #allocation6 [shape = 's32[1]{0}', space=sflag, size = 0x4, scoped, tag = 'scoped memory for tpu_custom_call.1']
    #allocation7 [shape = 'u8[4096]{0}', space=vmem, size = 0x1000, scoped, tag = 'output window, operand 0, single buffered']
    %9 = vsyncpa [#allocation3], 0
    %10 = vsyncpa [#allocation6], 0
    %11 = vsyncpa [#allocation4], 0
    // Predicated region
    $region2: #{tpu_custom_call.1} parent=1 // pred_check
      _
    $region3: #{tpu_custom_call.1} parent=1 // pred_check_branch
      %13 = sbr.rel (0) target = $region5
    $region4: #{tpu_custom_call.1} parent=1 // pred_region
      %s15 = ssub.s32 128, 64
      %16 = vsyncadd [#allocation3], %s15
      %s17 = sshll.u32 [#allocation2], 4
      %s18 = int_to_ptr.vmem [resolvable:$true] %s17
      %23 = dma.hbm_to_vmem [thread:$0]  %s0, 64, %s18, [#allocation3], 64, 64, 4
    $region5: #{tpu_custom_call.1} parent=1 // pred_fallthru
      _
    // Predicated region
    $region6: #{tpu_custom_call.1} parent=1 // pred_check
      _
    $region7: #{tpu_custom_call.1} parent=1 // pred_check_branch
      %25 = sbr.rel (0) target = $region9
    $region8: #{tpu_custom_call.1} parent=1 // pred_region
      %s27 = ssub.s32 128, 64
      %28 = vsyncadd [#allocation6], %s27
      %s29 = sshll.u32 [#allocation5], 4
      %s30 = int_to_ptr.vmem [resolvable:$true] %s29
      %35 = dma.hbm_to_vmem [thread:$0]  %s1, 64, %s30, [#allocation6], 64, 64, 4
    $region9: #{tpu_custom_call.1} parent=1 // pred_fallthru
      _
    // Predicated region
    $region10: #{tpu_custom_call.1} parent=1 // pred_check
      _
    $region11: #{tpu_custom_call.1} parent=1 // pred_check_branch
      %37 = sbr.rel (0) target = $region13
    $region12: #{tpu_custom_call.1} parent=1 // pred_region
      _
    $region13: #{tpu_custom_call.1} parent=1 // pred_fallthru
      _
    // Predicated region
    $region14: #{tpu_custom_call.1} parent=1 // pred_check
      _
    $region15: #{tpu_custom_call.1} parent=1 // pred_check_branch
      %39 = sbr.rel (0) target = $region17
    $region16: #{tpu_custom_call.1} parent=1 // pred_region
      _
    $region17: #{tpu_custom_call.1} parent=1 // pred_fallthru
      _
    // Predicated region
    $region18: #{tpu_custom_call.1} parent=1 // pred_check
      _
    $region19: #{tpu_custom_call.1} parent=1 // pred_check_branch
      %41 = sbr.rel (0) target = $region21
    $region20: #{tpu_custom_call.1} parent=1 // pred_region
      %42 = dma.done [#allocation3], 128
    $region21: #{tpu_custom_call.1} parent=1 // pred_fallthru
      _
    // Predicated region
    $region22: #{tpu_custom_call.1} parent=1 // pred_check
      _
    $region23: #{tpu_custom_call.1} parent=1 // pred_check_branch
      %44 = sbr.rel (0) target = $region25
    $region24: #{tpu_custom_call.1} parent=1 // pred_region
      %45 = dma.done [#allocation6], 128
    $region25: #{tpu_custom_call.1} parent=1 // pred_fallthru
      _
    %v46 = vld [vmem:[#allocation2] sm:$0xff]
    %v47 = vld [vmem:[#allocation5] sm:$0xff]
    %v48 = vadd.f32 %v46, %v47
    %v49 = vlaneseq
    %v50 = vand.u32 %v49, 127
    %v51 = vld [vmem:[%s2] sm:$0x1]
    %v52 = vld [vmem:[%s3] sm:$0x1]
    %vm53 = vcmp.ge.s32.totalorder %v50, 0
    %vm54 = vcmp.lt.s32.totalorder %v50, 32
    %vm55 = vmand %vm53, %vm54
    %v56 = vsel %vm55, 1.0, 0.0
    %v57 = vmul.f32 %v48, %v56
    %58 = vadd.xlane.f32.xlu0 %v57
    %v59 = vpop.xlane.xlu0 %58
    %v60 = vmul.f32 %v59, 0.03125
    %v61 = vsub.f32 %v48, %v60
    %v62 = vmul.f32 %v61, %v56
    %v63 = vmul.f32 %v62, %v62
    %64 = vadd.xlane.f32.xlu0 %v63
    %v65 = vpop.xlane.xlu0 %64
    %v66 = vmul.f32 %v65, 0.03125
    %v67 = vadd.f32 %v66, 1e-06
    %v68 = vrsqrt.pop %v67
    %v69 = vmul.f32 %v62, %v68
    %v71 = vlaneseq
    %v72 = vshrl.u32 %v71, 7
    %v73 = vsub.s32 0, %v72
    %v74 = vrot.slane %v51, %v73
    %v76 = vmul.f32 %v69, %v74
    %v77 = vadd.f32 %v76, 0.0
    %vm78 = vcmp.ge.s32.totalorder %v50, 32
    %vm79 = vcmp.lt.s32.totalorder %v50, 64
    %vm80 = vmand %vm78, %vm79
    %v81 = vsel %vm80, 1.0, 0.0
    %v82 = vmul.f32 %v48, %v81
    %83 = vadd.xlane.f32.xlu0 %v82
    %v84 = vpop.xlane.xlu0 %83
    %v85 = vmul.f32 %v84, 0.03125
    %v86 = vsub.f32 %v48, %v85
    %v87 = vmul.f32 %v86, %v81
    %v88 = vmul.f32 %v87, %v87
    %89 = vadd.xlane.f32.xlu0 %v88
    %v90 = vpop.xlane.xlu0 %89
    %v91 = vmul.f32 %v90, 0.03125
    %v92 = vadd.f32 %v91, 1e-06
    %v93 = vrsqrt.pop %v92
    %v94 = vmul.f32 %v87, %v93
    %v95 = vmul.f32 %v94, %v74
    %v96 = vadd.f32 %v77, %v95
    %vm97 = vcmp.ge.s32.totalorder %v50, 64
    %vm98 = vcmp.lt.s32.totalorder %v50, 96
    %vm99 = vmand %vm97, %vm98
    %v100 = vsel %vm99, 1.0, 0.0
    %v101 = vmul.f32 %v48, %v100
    %102 = vadd.xlane.f32.xlu0 %v101
    %v103 = vpop.xlane.xlu0 %102
    %v104 = vmul.f32 %v103, 0.03125
    %v105 = vsub.f32 %v48, %v104
    %v106 = vmul.f32 %v105, %v100
    %v107 = vmul.f32 %v106, %v106
    %108 = vadd.xlane.f32.xlu0 %v107
    %v109 = vpop.xlane.xlu0 %108
    %v110 = vmul.f32 %v109, 0.03125
    %v111 = vadd.f32 %v110, 1e-06
    %v112 = vrsqrt.pop %v111
    %v113 = vmul.f32 %v106, %v112
    %v114 = vmul.f32 %v113, %v74
    %v115 = vadd.f32 %v96, %v114
    %vm116 = vcmp.ge.s32.totalorder %v50, 96
    %vm117 = vcmp.lt.s32.totalorder %v50, 128
    %vm118 = vmand %vm116, %vm117
    %v119 = vsel %vm118, 1.0, 0.0
    %v120 = vmul.f32 %v48, %v119
    %121 = vadd.xlane.f32.xlu0 %v120
    %v122 = vpop.xlane.xlu0 %121
    %v123 = vmul.f32 %v122, 0.03125
    %v124 = vsub.f32 %v48, %v123
    %v125 = vmul.f32 %v124, %v119
    %v126 = vmul.f32 %v125, %v125
    %127 = vadd.xlane.f32.xlu0 %v126
    %v128 = vpop.xlane.xlu0 %127
    %v129 = vmul.f32 %v128, 0.03125
    %v130 = vadd.f32 %v129, 1e-06
    %v131 = vrsqrt.pop %v130
    %v132 = vmul.f32 %v125, %v131
    %v133 = vmul.f32 %v132, %v74
    %v134 = vadd.f32 %v115, %v133
    %v136 = vlaneseq
    %v137 = vshrl.u32 %v136, 7
    %v138 = vsub.s32 0, %v137
    %v139 = vrot.slane %v52, %v138
    %v141 = vadd.f32 %v134, %v139
    %142 = vst [vmem:[#allocation7] sm:$0xff] %v141
    // Predicated region
    $region26: #{tpu_custom_call.1} parent=1 // pred_check
      _
    $region27: #{tpu_custom_call.1} parent=1 // pred_check_branch
      %144 = sbr.rel (0) target = $region29
    $region28: #{tpu_custom_call.1} parent=1 // pred_region
      %s146 = ssub.s32 128, 64
      %147 = vsyncadd [#allocation4], %s146
      %s148 = sshll.u32 [#allocation7], 4
      %s149 = int_to_ptr.vmem [resolvable:$true] %s148
      %154 = dma.vmem_to_hbm [thread:$0]  %s149, 64, %s4, [#allocation4], 64, 64, 4
    $region29: #{tpu_custom_call.1} parent=1 // pred_fallthru
      _
    // Predicated region
    $region30: #{tpu_custom_call.1} parent=1 // pred_check
      _
    $region31: #{tpu_custom_call.1} parent=1 // pred_check_branch
      %156 = sbr.rel (0) target = $region33
    $region32: #{tpu_custom_call.1} parent=1 // pred_region
      %157 = dma.done [#allocation4], 128
    $region33: #{tpu_custom_call.1} parent=1 // pred_fallthru
      _
    %158 = vsyncpa [#allocation3], 1
    %159 = vsyncpa [#allocation6], 1
    %160 = vsyncpa [#allocation4], 1

</llo_original>
